<compile_context>
chip_gen: v7x
topology: tpu7x:2x2x1
jax: 0.10.0
libtpu: 0.0.40
codegen_flags: <defaults>
</compile_context>

<pallas_src>
import jax
import jax.numpy as jnp
from jax.experimental import pallas as pl
from jax.experimental.pallas import tpu as pltpu

_LANES = 128
_PATTERN_ROWS = 24          # lcm(3-element pattern period, 8-row sublane granularity)
_MAX_TILE_ROWS = 4080       # multiple of 24; ~2 MiB per (tile_rows, 128) f32 buffer


def _round_up(a, m):
    return -(-a // m) * m


def _mean_slab_kernel(pattern_ref, o_ref):
    # Pure copy: pattern tile is VMEM-resident (constant block index), so each
    # grid step is just vld/vst pairs -> store-slot / HBM-writeback bound.
    o_ref[...] = pattern_ref[...]


def mean_predictor_forward(x, edge_index, mean):
    """Pallas equivalent of MeanPredictor.forward.

    x:          (N, F) float32 node features (only N is used, matching PyTorch)
    edge_index: (2, E) int32 (unused in compute, matching PyTorch)
    mean:       (3,)   float32 mean-velocity vector (the module's self.mean)
    returns:    (N, 3) float32, every row == mean
    """
    del edge_index  # unused by the reference forward pass
    n = int(x.shape[0])
    out_dim = int(mean.shape[0])  # 3

    # Lane-dense slab geometry: all N*3 scalars packed densely over 128 lanes.
    total = n * out_dim
    rows_needed = max(1, -(-total // _LANES))

    # Balanced tiles, each a multiple of 24 rows. Force >= 2 tiles for
    # non-tiny N so the "parallel" grid axis shards writeback across both
    # TensorCores on v7x.
    num_tiles = -(-rows_needed // _MAX_TILE_ROWS)
    if rows_needed > _PATTERN_ROWS:
        num_tiles = max(2, num_tiles)
    tile_rows = _round_up(-(-rows_needed // num_tiles), _PATTERN_ROWS)
    rows_total = tile_rows * num_tiles

    mean_f32 = mean.astype(jnp.float32).reshape(out_dim)

    # One full tile of the repeating pattern, built once in the wrapper
    # (<= ~2 MiB). base[r, c] == mean[(r*128 + c) % 3]; since 24*128 % 3 == 0
    # and tile_rows % 3 == 0, row-tiling the 24-row base and repeating the same
    # tile across the grid reproduces the exact global phase.
    base = jnp.tile(mean_f32, (_PATTERN_ROWS * _LANES) // out_dim).reshape(
        _PATTERN_ROWS, _LANES)
    pattern = jnp.tile(base, (tile_rows // _PATTERN_ROWS, 1))

    slab = pl.pallas_call(
        _mean_slab_kernel,
        out_shape=jax.ShapeDtypeStruct((rows_total, _LANES), jnp.float32),
        grid_spec=pltpu.PrefetchScalarGridSpec(
            num_scalar_prefetch=0,
            grid=(num_tiles,),
            in_specs=[
                # Constant block index -> stays resident in VMEM, no re-DMA
                # across grid steps.
                pl.BlockSpec((tile_rows, _LANES), lambda i: (0, 0)),
            ],
            out_specs=pl.BlockSpec((tile_rows, _LANES), lambda i: (i, 0)),
        ),
        compiler_params=pltpu.CompilerParams(
            dimension_semantics=("parallel",),
        ),
        cost_estimate=pl.CostEstimate(
            flops=0,
            transcendentals=0,
            bytes_accessed=(rows_total + tile_rows) * _LANES * 4,
        ),
    )(pattern)

    # Layout plumbing: lane-dense slab -> (N, 3). Under jit with a downstream
    # consumer this slice fuses away; standalone it is one extra N*12-byte copy,
    # still far cheaper than a direct (N, 3) kernel output whose 3-lane masked
    # stores would be vst-slot bound (~16x more store ops per row of output).
    return slab.reshape(-1)[:total].reshape(n, out_dim)


if __name__ == "__main__":
    key = jax.random.PRNGKey(0)
    k_x, k_e, k_y = jax.random.split(key, 3)

    N, F_IN, E = 16, 7, 24  # input_dim=7 per module __init__
    x = jax.random.normal(k_x, (N, F_IN), dtype=jnp.float32)
    edge_index = jax.random.randint(k_e, (2, E), 0, N, dtype=jnp.int32)

    # Deterministic stand-in for train_model(): sums velocity columns 3:6 over
    # 3 "graphs" and divides by total_points=3, exactly as the PyTorch code does.
    y_synth = jax.random.normal(k_y, (3, N, 6), dtype=jnp.float32)
    mean = y_synth[:, :, 3:6].sum(axis=(0, 1)) / 3.0  # shape (3,)

    # Main case.
    pred = mean_predictor_forward(x, edge_index, mean)
    jax.block_until_ready(pred)
    ref = jnp.broadcast_to(mean.reshape(1, 3), (N, 3))
    assert pred.shape == (N, 3) and pred.dtype == jnp.float32
    assert bool(jnp.allclose(pred, ref)), "mismatch vs reference broadcast"

    # Arbitrary N (not a multiple of 8) — the PyTorch forward accepts any N.
    N2 = 13
    x2 = jax.random.normal(k_x, (N2, F_IN), dtype=jnp.float32)
    pred2 = mean_predictor_forward(x2, edge_index, mean)
    jax.block_until_ready(pred2)
    ref2 = jnp.broadcast_to(mean.reshape(1, 3), (N2, 3))
    assert pred2.shape == (N2, 3)
    assert bool(jnp.allclose(pred2, ref2)), "mismatch vs reference broadcast (N=13)"

    # Multi-tile case (grid=(2,), last tile partially padded).
    N3 = 3001
    x3 = jax.random.normal(k_x, (N3, F_IN), dtype=jnp.float32)
    pred3 = mean_predictor_forward(x3, edge_index, mean)
    jax.block_until_ready(pred3)
    ref3 = jnp.broadcast_to(mean.reshape(1, 3), (N3, 3))
    assert pred3.shape == (N3, 3)
    assert bool(jnp.allclose(pred3, ref3)), "mismatch vs reference broadcast (N=3001)"

    print("KERNEL_OK")
</pallas_src>

<mosaic_0001>
module attributes {stable_mosaic.version = 11 : i64} {
  func.func @_mean_slab_kernel(%arg0: i32, %arg1: memref<24x128xf32, #tpu.memory_space<vmem>>, %arg2: memref<24x128xf32, #tpu.memory_space<vmem>>) attributes {dimension_semantics = [#tpu.dimension_semantics<parallel>], iteration_bounds = array<i64: 1>, scalar_prefetch = 0 : i64, scratch_operands = 0 : i64, tpu.core_type = #tpu.core_type<tc>, window_params = [{pipeline_mode = #tpu.pipeline_mode<synchronous>, transform_indices = @transform_0, window_bounds = array<i64: 24, 128>}, {transform_indices = @transform_1, window_bounds = array<i64: 24, 128>}]} {
    %c0 = arith.constant 0 : index
    %c0_0 = arith.constant 0 : index
    %0 = vector.load %arg1[%c0, %c0_0] : memref<24x128xf32, #tpu.memory_space<vmem>>, vector<24x128xf32>
    %c0_1 = arith.constant 0 : index
    %c0_2 = arith.constant 0 : index
    %1 = vector.load %arg2[%c0_1, %c0_2] : memref<24x128xf32, #tpu.memory_space<vmem>>, vector<24x128xf32>
    tpu.vector_store %arg2[%c0_1, %c0_2], %0 {strides = array<i32>} : memref<24x128xf32, #tpu.memory_space<vmem>>, vector<24x128xf32>,
    return
  }
  func.func @transform_0(%arg0: i32) -> (i32, i32) {
    %c0_i32 = arith.constant 0 : i32
    %c0_i32_0 = arith.constant 0 : i32
    %c0_i32_1 = arith.constant 0 : i32
    return %c0_i32, %c0_i32_0 : i32, i32
  }
  func.func @transform_1(%arg0: i32) -> (i32, i32) {
    %c0_i32 = arith.constant 0 : i32
    %c0_i32_0 = arith.constant 0 : i32
    return %arg0, %c0_i32 : i32, i32
  }
}

</mosaic_0001>

<llo_original>
// kernel: tpu_custom_call.1
$region0: #{tpu_custom_call.1}
  #allocation0 [shape = 'u32[]', space=smem, size = 0x4, offset = 0x4, fixed_abs, tag = 'smem constant byte address 0x4 - core index']
  #allocation1 [shape = 'u32[144,128]{1,0:T(1,128)}', space=vmem, size = 0x12000, scoped, tag = 'internal scratch']
  %s0 = inlined_call_operand.hbm [shape: f32[24,128], index: 0, kind: input, shape index: {}]
  %s1 = inlined_call_operand.hbm [shape: f32[24,128], index: 1, kind: output, shape index: {}]
  %s2 = sld [smem:[#allocation0]]
  $region18: #{tpu_custom_call.1} parent=0
    _
  %s4 = ssub.s32 1, %s2
  %s5 = scalar_select 0, %s4, %s2
  $region1: #{tpu_custom_call.1} parent=0
    #allocation2 [shape = 'u8[12288]{0}', space=vmem, size = 0x3000, scoped, tag = 'input window, operand 0, single buffered']
    #allocation3 [shape = 's32[1]{0}', space=sflag, size = 0x4, scoped, tag = 'scoped memory for tpu_custom_call.1']
    #allocation4 [shape = 's32[1]{0}', space=sflag, size = 0x4, scoped, tag = 'scoped memory for tpu_custom_call.1']
    #allocation5 [shape = 'u8[12288]{0}', space=vmem, size = 0x3000, scoped, tag = 'output window, operand 0, single buffered']
    %6 = vsyncpa [#allocation3], 0
    %7 = vsyncpa [#allocation4], 0
    // Predicated region
    $region2: #{tpu_custom_call.1} parent=1 // pred_check
      _
    $region3: #{tpu_custom_call.1} parent=1 // pred_check_branch
      %9 = sbr.rel (0) target = $region5
    $region4: #{tpu_custom_call.1} parent=1 // pred_region
      %s11 = ssub.s32 384, 384
      %12 = vsyncadd [#allocation3], %s11
      %s13 = sshll.u32 [#allocation2], 4
      %s14 = int_to_ptr.vmem [resolvable:$true] %s13
      %19 = dma.hbm_to_vmem [thread:$0]  %s0, 384, %s14, [#allocation3], 128, 128, 8
    $region5: #{tpu_custom_call.1} parent=1 // pred_fallthru
      _
    // Predicated region
    $region6: #{tpu_custom_call.1} parent=1 // pred_check
      _
    $region7: #{tpu_custom_call.1} parent=1 // pred_check_branch
      %21 = sbr.rel (0) target = $region9
    $region8: #{tpu_custom_call.1} parent=1 // pred_region
      %22 = dma.done [#allocation3], 384
    $region9: #{tpu_custom_call.1} parent=1 // pred_fallthru
      _
    %v23 = vld [vmem:[#allocation2] sm:$0xff]
    %v24 = vld [vmem:[#allocation2 + $0x8] sm:$0xff]
    %v25 = vld [vmem:[#allocation2 + $0x10] sm:$0xff]
    %26 = vst [vmem:[#allocation5] sm:$0xff] %v23
    %27 = vst [vmem:[#allocation5 + $0x8] sm:$0xff] %v24
    %28 = vst [vmem:[#allocation5 + $0x10] sm:$0xff] %v25
    // Predicated region
    $region10: #{tpu_custom_call.1} parent=1 // pred_check
      _
    $region11: #{tpu_custom_call.1} parent=1 // pred_check_branch
      %30 = sbr.rel (0) target = $region13
    $region12: #{tpu_custom_call.1} parent=1 // pred_region
      %s32 = ssub.s32 384, 384
      %33 = vsyncadd [#allocation4], %s32
      %s34 = sshll.u32 [#allocation5], 4
      %s35 = int_to_ptr.vmem [resolvable:$true] %s34
      %40 = dma.vmem_to_hbm [thread:$0]  %s35, 384, %s1, [#allocation4], 128, 128, 8
    $region13: #{tpu_custom_call.1} parent=1 // pred_fallthru
      _
    // Predicated region
    $region14: #{tpu_custom_call.1} parent=1 // pred_check
      _
    $region15: #{tpu_custom_call.1} parent=1 // pred_check_branch
      %42 = sbr.rel (0) target = $region17
    $region16: #{tpu_custom_call.1} parent=1 // pred_region
      %43 = dma.done [#allocation4], 384
    $region17: #{tpu_custom_call.1} parent=1 // pred_fallthru
      _
    %44 = vsyncpa [#allocation3], 1
    %45 = vsyncpa [#allocation4], 1

</llo_original>
